<compile_context>
chip_gen: v6e
topology: v6e:2x2x1
jax: 0.10.0
libtpu: 0.0.40
codegen_flags: <defaults>
</compile_context>

<pallas_src>
import jax
import jax.numpy as jnp
from jax.experimental import pallas as pl
from jax.experimental.pallas import tpu as pltpu

_LANE = 128
_MiB = 1 << 20


def _round_up(v, m):
    return ((v + m - 1) // m) * m


def _vmem_capacity_bytes():
    """Physical VMEM of the current chip; conservative default if unknown."""
    try:
        return int(pltpu.get_tpu_info().vmem_capacity_bytes)
    except Exception:
        return 64 * _MiB  # v7x per-TC size == smallest of current generations


def _swish_kernel(x_ref, o_ref):
    x = x_ref[...]
    # Keep f32/bf16 math native; promote anything narrower (or integer) to f32.
    if x.dtype == jnp.float32 or x.dtype == jnp.bfloat16:
        xc = x
    else:
        xc = x.astype(jnp.float32)
    # sigmoid(x) = 0.5*tanh(0.5*x) + 0.5 : single EUP op, numerically stable
    # (no exp(-x) overflow), no exact-divide chain on the VPU.
    sig = 0.5 * jnp.tanh(xc * 0.5) + 0.5
    o_ref[...] = (xc * sig).astype(o_ref.dtype)


def _swish_2d(x2d, block_rows):
    """Run the streaming kernel on a lane-dense (rows, lane) slab."""
    rows, lane = x2d.shape
    grid = (pl.cdiv(rows, block_rows),)
    tile_bytes = block_rows * lane * x2d.dtype.itemsize
    # Actual need: 2 double-buffered copies each of input and output tiles,
    # plus headroom for compiler scratch; never more than 75% of physical VMEM.
    vmem_limit = min(int(_vmem_capacity_bytes() * 3 // 4),
                     4 * tile_bytes + 8 * _MiB)
    return pl.pallas_call(
        _swish_kernel,
        out_shape=jax.ShapeDtypeStruct((rows, lane), x2d.dtype),
        grid_spec=pltpu.PrefetchScalarGridSpec(
            num_scalar_prefetch=0,
            grid=grid,
            in_specs=[pl.BlockSpec((block_rows, lane), lambda i: (i, 0))],
            out_specs=pl.BlockSpec((block_rows, lane), lambda i: (i, 0)),
        ),
        compiler_params=pltpu.CompilerParams(
            dimension_semantics=("parallel",),
            vmem_limit_bytes=vmem_limit,
        ),
    )(x2d)


def swish(x, *, tile_bytes=8 * _MiB):
    """Elementwise swish for any shape/dtype.

    The 128-aligned prefix is streamed through the Pallas kernel on a
    lane-dense 2-D view; a <128-element ragged tail (rare for NN activations)
    is handled with plain jnp so no whole-array pad/slice traffic is incurred.
    """
    orig_shape = x.shape
    dtype = x.dtype
    n = x.size
    if n == 0:
        return x

    flat = x.reshape(-1)
    n_main = (n // _LANE) * _LANE

    if n_main == 0:
        # Fewer than 128 elements: a kernel launch is pure overhead.
        xf = flat.astype(jnp.float32)
        return (xf * jax.nn.sigmoid(xf)).astype(dtype).reshape(orig_shape)

    # Widest lane-dense layout the element count allows (bigger unmasked
    # vld/vst runs, fewer sublane rows per tile for the same bytes).
    lane = _LANE
    for cand in (1024, 512, 256):
        if n_main % cand == 0:
            lane = cand
            break
    rows = n_main // lane

    itemsize = jnp.dtype(dtype).itemsize
    sub = max(8, 32 // itemsize)  # sublane packing multiple (8/16/32)

    # ~8 MiB tiles amortise the per-grid-step overhead even at v7x bandwidth;
    # round down to a legal sublane multiple.
    max_block_rows = max(sub, (tile_bytes // (lane * itemsize)) // sub * sub)

    if rows >= 2 * sub:
        # Guarantee >= 2 (even) grid steps so the "parallel" axis can shard
        # across both TensorCores on v7x.
        half_rows = _round_up(pl.cdiv(rows, 2), sub)
        block_rows = min(max_block_rows, half_rows)
    else:
        block_rows = rows  # single full-extent block (always a legal shape)

    # TODO(synk): add pipeline_mode=pl.Buffered(3) on the input spec if xprof
    # shows step-boundary gaps on v7x after the tile enlargement.

    main = flat if n_main == n else flat[:n_main]
    out_flat = _swish_2d(main.reshape(rows, lane), block_rows).reshape(-1)

    if n_main != n:
        # <128-element ragged tail via plain jnp (stable sigmoid), per review.
        tail = flat[n_main:].astype(jnp.float32)
        tail_out = (tail * jax.nn.sigmoid(tail)).astype(dtype)
        out_flat = jnp.concatenate([out_flat, tail_out])

    return out_flat.reshape(orig_shape)


if __name__ == "__main__":
    key = jax.random.PRNGKey(0)
    k1, k2, k3 = jax.random.split(key, 3)

    # NCHW input, as the PyTorch module would see it.
    x = jax.random.normal(k1, (2, 4, 16, 16), dtype=jnp.float32)
    y = jax.block_until_ready(swish(x))
    y_ref = x * jax.nn.sigmoid(x)
    assert y.shape == x.shape and y.dtype == x.dtype
    assert jnp.allclose(y, y_ref, atol=1e-5, rtol=1e-5)

    # Larger input exercising the multi-step "parallel" grid path.
    x2 = jax.random.normal(k2, (4, 32, 64, 64), dtype=jnp.float32)
    y2 = jax.block_until_ready(swish(x2))
    y2_ref = x2 * jax.nn.sigmoid(x2)
    assert y2.shape == x2.shape and y2.dtype == x2.dtype
    assert jnp.allclose(y2, y2_ref, atol=1e-5, rtol=1e-5)

    # Ragged path: kernel on the 128-aligned prefix + jnp tail (no pad/slice).
    x3 = jax.random.normal(k3, (3, 5, 31), dtype=jnp.float32)  # 465 elements
    y3 = jax.block_until_ready(swish(x3))
    y3_ref = x3 * jax.nn.sigmoid(x3)
    assert y3.shape == x3.shape and y3.dtype == x3.dtype
    assert jnp.allclose(y3, y3_ref, atol=1e-5, rtol=1e-5)

    print("KERNEL_OK")
</pallas_src>

<mosaic_0001>
module attributes {stable_mosaic.version = 11 : i64} {
  func.func @_swish_kernel(%arg0: i32, %arg1: memref<2x1024xf32, #tpu.memory_space<vmem>>, %arg2: memref<2x1024xf32, #tpu.memory_space<vmem>>) attributes {dimension_semantics = [#tpu.dimension_semantics<parallel>], iteration_bounds = array<i64: 1>, scalar_prefetch = 0 : i64, scratch_operands = 0 : i64, tpu.core_type = #tpu.core_type<tc>, window_params = [{transform_indices = @transform_0, window_bounds = array<i64: 2, 1024>}, {transform_indices = @transform_1, window_bounds = array<i64: 2, 1024>}]} {
    %c0 = arith.constant 0 : index
    %c0_0 = arith.constant 0 : index
    %0 = vector.load %arg1[%c0, %c0_0] : memref<2x1024xf32, #tpu.memory_space<vmem>>, vector<2x1024xf32>
    %cst = arith.constant 5.000000e-01 : f32
    %1 = vector.broadcast %cst : f32 to vector<2x1024xf32>
    %2 = arith.mulf %0, %1 : vector<2x1024xf32>
    %3 = math.tanh %2 : vector<2x1024xf32>
    %cst_1 = arith.constant 5.000000e-01 : f32
    %4 = vector.broadcast %cst_1 : f32 to vector<2x1024xf32>
    %5 = arith.mulf %4, %3 : vector<2x1024xf32>
    %cst_2 = arith.constant 5.000000e-01 : f32
    %6 = vector.broadcast %cst_2 : f32 to vector<2x1024xf32>
    %7 = arith.addf %5, %6 : vector<2x1024xf32>
    %8 = arith.mulf %0, %7 : vector<2x1024xf32>
    %c0_3 = arith.constant 0 : index
    %c0_4 = arith.constant 0 : index
    %9 = vector.load %arg2[%c0_3, %c0_4] : memref<2x1024xf32, #tpu.memory_space<vmem>>, vector<2x1024xf32>
    tpu.vector_store %arg2[%c0_3, %c0_4], %8 {strides = array<i32>} : memref<2x1024xf32, #tpu.memory_space<vmem>>, vector<2x1024xf32>,
    return
  }
  func.func @transform_0(%arg0: i32) -> (i32, i32) {
    %c0_i32 = arith.constant 0 : i32
    %c0_i32_0 = arith.constant 0 : i32
    return %arg0, %c0_i32 : i32, i32
  }
  func.func @transform_1(%arg0: i32) -> (i32, i32) {
    %c0_i32 = arith.constant 0 : i32
    %c0_i32_0 = arith.constant 0 : i32
    return %arg0, %c0_i32 : i32, i32
  }
}

</mosaic_0001>

<llo_original>
// kernel: tpu_custom_call.1
$region0: #{tpu_custom_call.1}
  #allocation0 [shape = 'u32[]', space=smem, size = 0x4, offset = 0x4, fixed_abs, tag = 'smem constant byte address 0x4 - core index']
  #allocation1 [shape = 'u32[144,128]{1,0:T(1,128)}', space=vmem, size = 0x12000, scoped, tag = 'internal scratch']
  %s0 = inlined_call_operand.hbm [shape: f32[2,1024], index: 0, kind: input, shape index: {}]
  %s1 = inlined_call_operand.hbm [shape: f32[2,1024], index: 1, kind: output, shape index: {}]
  %s2 = sld [smem:[#allocation0]]
  $region18: #{tpu_custom_call.1} parent=0
    _
  %s4 = ssub.s32 1, %s2
  %s5 = scalar_select 0, %s4, %s2
  $region1: #{tpu_custom_call.1} parent=0
    #allocation2 [shape = 'u8[8192]{0}', space=vmem, size = 0x2000, scoped, tag = 'input window, operand 0, single buffered']
    #allocation3 [shape = 's32[1]{0}', space=sflag, size = 0x4, scoped, tag = 'scoped memory for tpu_custom_call.1']
    #allocation4 [shape = 's32[1]{0}', space=sflag, size = 0x4, scoped, tag = 'scoped memory for tpu_custom_call.1']
    #allocation5 [shape = 'u8[8192]{0}', space=vmem, size = 0x2000, scoped, tag = 'output window, operand 0, single buffered']
    %6 = vsyncpa [#allocation3], 0
    %7 = vsyncpa [#allocation4], 0
    // Predicated region
    $region2: #{tpu_custom_call.1} parent=1 // pred_check
      _
    $region3: #{tpu_custom_call.1} parent=1 // pred_check_branch
      %9 = sbr.rel (0) target = $region5
    $region4: #{tpu_custom_call.1} parent=1 // pred_region
      %s11 = ssub.s32 256, 256
      %12 = vsyncadd [#allocation3], %s11
      %s14 = sshll.u32 [#allocation2], 4
      %s15 = int_to_ptr.vmem [resolvable:$true] %s14
      %17 = dma.hbm_to_vmem [thread:$0]  %s0, 256, %s15, [#allocation3]
    $region5: #{tpu_custom_call.1} parent=1 // pred_fallthru
      _
    // Predicated region
    $region6: #{tpu_custom_call.1} parent=1 // pred_check
      _
    $region7: #{tpu_custom_call.1} parent=1 // pred_check_branch
      %19 = sbr.rel (0) target = $region9
    $region8: #{tpu_custom_call.1} parent=1 // pred_region
      %20 = dma.done [#allocation3], 256
    $region9: #{tpu_custom_call.1} parent=1 // pred_fallthru
      _
    %v21 = vld [vmem:[#allocation2] sm:$0xff]
    %v22 = vld [vmem:[#allocation2 + $0x8] sm:$0xff]
    %v23 = vmul.f32 %v21, 0.5
    %v24 = vmul.f32 %v22, 0.5
    %v25 = vtanh.pop %v23
    %v26 = vtanh.pop %v24
    %v27 = vmul.f32 %v25, 0.5
    %v28 = vmul.f32 %v26, 0.5
    %v29 = vadd.f32 %v27, 0.5
    %v30 = vadd.f32 %v28, 0.5
    %v31 = vmul.f32 %v21, %v29
    %v32 = vmul.f32 %v22, %v30
    %33 = vst [vmem:[#allocation5] sm:$0xff] %v31
    %34 = vst [vmem:[#allocation5 + $0x8] sm:$0xff] %v32
    // Predicated region
    $region10: #{tpu_custom_call.1} parent=1 // pred_check
      _
    $region11: #{tpu_custom_call.1} parent=1 // pred_check_branch
      %36 = sbr.rel (0) target = $region13
    $region12: #{tpu_custom_call.1} parent=1 // pred_region
      %s38 = ssub.s32 256, 256
      %39 = vsyncadd [#allocation4], %s38
      %s41 = sshll.u32 [#allocation5], 4
      %s42 = int_to_ptr.vmem [resolvable:$true] %s41
      %44 = dma.vmem_to_hbm [thread:$0]  %s42, 256, %s1, [#allocation4]
    $region13: #{tpu_custom_call.1} parent=1 // pred_fallthru
      _
    // Predicated region
    $region14: #{tpu_custom_call.1} parent=1 // pred_check
      _
    $region15: #{tpu_custom_call.1} parent=1 // pred_check_branch
      %46 = sbr.rel (0) target = $region17
    $region16: #{tpu_custom_call.1} parent=1 // pred_region
      %47 = dma.done [#allocation4], 256
    $region17: #{tpu_custom_call.1} parent=1 // pred_fallthru
      _
    %48 = vsyncpa [#allocation3], 1
    %49 = vsyncpa [#allocation4], 1

</llo_original>
